<compile_context>
chip_gen: v7x
topology: tpu7x:2x2x1
jax: 0.10.0
libtpu: 0.0.40
codegen_flags: <defaults>
</compile_context>

<pallas_src>
import functools

import jax
import jax.numpy as jnp
from jax import lax
from jax.experimental import pallas as pl
from jax.experimental.pallas import tpu as pltpu


def _round_up(x: int, m: int) -> int:
    return ((x + m - 1) // m) * m


def _pick_batch_block(batch: int, requested: int) -> int:
    """MXU-sized batch block, capped so large batches keep >=2 grid steps."""
    bp8 = _round_up(batch, 8)
    blk = min(_round_up(requested, 8), bp8)
    # v7x megacore: keep >= 2 steps on the parallel batch axis whenever that
    # still leaves an MXU-sized (>=128) M edge per block.
    if bp8 >= 256 and blk > bp8 // 2:
        blk = _round_up(bp8 // 2, 8)
    return max(blk, 8)


def _const_spec(block_shape):
    """BlockSpec for a grid-invariant operand; single-buffer if supported."""
    ndim = len(block_shape)
    index_map = lambda b, s, _n=ndim: (0,) * _n
    try:
        return pl.BlockSpec(block_shape, index_map, pipeline_mode=pl.Buffered(1))
    except TypeError:
        return pl.BlockSpec(block_shape, index_map)


# ----------------------------- Pallas kernel -------------------------------

def rhn_kernel(xproj_ref,   # [Schunk, Bblk, Hp]  compute dtype (bf16/f32)
               w_cat_ref,   # [depth, Hp, 2*Hp]   compute dtype (gate | layer)
               b_cat_ref,   # [depth, 1, 2*Hp]    f32
               w_fc_ref,    # [Hp, Cp]            compute dtype
               b_fc_ref,    # [1, Cp]             f32
               out_ref,     # [Bblk, Cp]          f32
               h_acc_ref,   # VMEM scratch [Bblk, Hp] f32 (persists across s)
               *, depth: int, seq_len: int, mask_time: bool):
    s_chunk, b_blk, hp = xproj_ref.shape
    cdt = w_cat_ref.dtype
    s = pl.program_id(1)

    @pl.when(s == 0)
    def _init():
        h_acc_ref[...] = jnp.zeros_like(h_acc_ref)

    # All (t, b) rows of this chunk are independent (h_prev only enters via the
    # final add in the reference), so run the highway depth loop on one big
    # [Schunk*Bblk, Hp] slab -> MXU-shaped M regardless of batch size.
    m = s_chunk * b_blk
    h = xproj_ref[...].reshape(m, hp).astype(jnp.float32)
    for i in range(depth):                           # depth is static
        gl = jnp.dot(h.astype(cdt), w_cat_ref[i],
                     preferred_element_type=jnp.float32) + b_cat_ref[i]
        t_gate = jax.nn.sigmoid(gl[:, :hp])
        h_layer = jnp.tanh(gl[:, hp:])
        h = h + t_gate * (h_layer - h)               # == t*h_layer + (1-t)*h

    contrib = h.reshape(s_chunk, b_blk, hp)
    if mask_time:                                    # zero out padded time steps
        t_idx = s * s_chunk + lax.broadcasted_iota(
            jnp.int32, (s_chunk, b_blk, hp), 0)
        contrib = jnp.where(t_idx < seq_len, contrib, 0.0)
    h_acc_ref[...] += jnp.sum(contrib, axis=0)

    @pl.when(s == pl.num_programs(1) - 1)
    def _finalize():
        h_final = h_acc_ref[...]
        out_ref[...] = (jnp.dot(h_final.astype(cdt), w_fc_ref[...],
                                preferred_element_type=jnp.float32)
                        + b_fc_ref[...])


# ------------------------------- wrapper ------------------------------------

def rhn_net_forward(x_tokens, params, *, depth: int, batch_block: int = 128,
                    target_rows: int = 512, use_bf16: bool = True):
    """x_tokens: int32 [B, S] token ids. Returns logits [B, C] (float32)."""
    emb_table = params["embedding"]            # [V, E]
    w_in, b_in = params["w_in"], params["b_in"]
    wl, bl = params["w_layers"], params["b_layers"]
    wg, bg = params["w_gates"], params["b_gates"]
    w_fc, b_fc = params["w_fc"], params["b_fc"]

    B, S = x_tokens.shape
    H = w_in.shape[1]
    C = w_fc.shape[1]

    Hp = _round_up(H, 128)
    Cp = _round_up(C, 128)

    Bblk = _pick_batch_block(B, batch_block)
    Bp = _round_up(B, Bblk)
    Schunk = max(1, min(S, max(1, target_rows // Bblk)))
    Sp = _round_up(S, Schunk)
    mask_time = (Sp != S)

    f32 = jnp.float32
    cdt = jnp.bfloat16 if use_bf16 else f32

    def pad2(a, r, c):
        return jnp.pad(a.astype(f32), ((0, r - a.shape[0]), (0, c - a.shape[1])))

    def pad3(a, r, c):
        return jnp.pad(a.astype(f32), ((0, 0), (0, r - a.shape[1]), (0, c - a.shape[2])))

    # ---- Fold W_in / b_in into the embedding table (gather == one-hot matmul).
    emb_proj = jnp.dot(emb_table.astype(f32), w_in.astype(f32),
                       precision=lax.Precision.HIGHEST) + b_in.astype(f32)   # [V, H]
    emb_proj = jnp.pad(emb_proj, ((0, 0), (0, Hp - H)))                       # [V, Hp]

    # Gather directly time-major; pad batch + seq (padded steps masked in kernel).
    # TODO(synk): for huge V, gather in-kernel via scalar-prefetched token ids
    # (pl.Element) instead of materialising the [S, B, Hp] slab in HBM.
    xproj = jnp.take(emb_proj, x_tokens.T, axis=0)                            # [S, B, Hp]
    xproj = jnp.pad(xproj, ((0, Sp - S), (0, Bp - B), (0, 0))).astype(cdt)

    # ---- Fused (gate | layer) weights, zero-padded to MXU granularity. -------
    w_cat = jnp.concatenate([pad3(wg, Hp, Hp), pad3(wl, Hp, Hp)], axis=-1).astype(cdt)
    b_cat = jnp.concatenate([pad3(bg, 1, Hp), pad3(bl, 1, Hp)], axis=-1)      # f32
    w_fc_p = pad2(w_fc, Hp, Cp).astype(cdt)
    b_fc_p = pad2(b_fc, 1, Cp)                                                # f32

    # ---- VMEM budget sized from actual buffers; cap below v7x 64 MiB/core. ---
    itemsize = jnp.dtype(cdt).itemsize
    weight_bytes = w_cat.nbytes + b_cat.nbytes + w_fc_p.nbytes + b_fc_p.nbytes
    x_block_bytes = 2 * Schunk * Bblk * Hp * itemsize      # double-buffered input
    out_block_bytes = 2 * Bblk * Cp * 4                    # double-buffered output
    scratch_bytes = Bblk * Hp * 4                          # h accumulator
    tmp_bytes = 5 * Schunk * Bblk * Hp * 4                 # h / gl / gate temporaries
    vmem_limit = int(min(56 * 2**20,
                         max(32 * 2**20,
                             weight_bytes + x_block_bytes + out_block_bytes
                             + scratch_bytes + tmp_bytes + 8 * 2**20)))

    kernel = functools.partial(rhn_kernel, depth=depth, seq_len=S,
                               mask_time=mask_time)

    out_p = pl.pallas_call(
        kernel,
        out_shape=jax.ShapeDtypeStruct((Bp, Cp), jnp.float32),
        grid_spec=pltpu.PrefetchScalarGridSpec(
            num_scalar_prefetch=0,
            grid=(Bp // Bblk, Sp // Schunk),
            in_specs=[
                pl.BlockSpec((Schunk, Bblk, Hp), lambda b, s: (s, b, 0)),
                _const_spec((depth, Hp, 2 * Hp)),
                _const_spec((depth, 1, 2 * Hp)),
                _const_spec((Hp, Cp)),
                _const_spec((1, Cp)),
            ],
            out_specs=pl.BlockSpec((Bblk, Cp), lambda b, s: (b, 0)),
            scratch_shapes=[pltpu.VMEM((Bblk, Hp), jnp.float32)],
        ),
        compiler_params=pltpu.CompilerParams(
            dimension_semantics=("parallel", "arbitrary"),
            vmem_limit_bytes=vmem_limit,
        ),
    )(xproj, w_cat, b_cat, w_fc_p, b_fc_p)

    return out_p[:B, :C]


# ------------------------- pure-JAX reference --------------------------------

def rhn_net_reference(x_tokens, params, *, depth: int):
    hp = lax.Precision.HIGHEST
    emb = jnp.take(params["embedding"], x_tokens, axis=0)    # [B, S, E]
    B, S, _ = emb.shape
    H = params["w_in"].shape[1]
    h = jnp.zeros((B, H), jnp.float32)
    for t in range(S):
        x_t = emb[:, t, :]
        h_prev = h
        hh = jnp.dot(x_t, params["w_in"], precision=hp) + params["b_in"]
        for i in range(depth):
            t_gate = jax.nn.sigmoid(
                jnp.dot(hh, params["w_gates"][i], precision=hp) + params["b_gates"][i])
            h_layer = jnp.tanh(
                jnp.dot(hh, params["w_layers"][i], precision=hp) + params["b_layers"][i])
            hh = t_gate * h_layer + (1.0 - t_gate) * hh
        h = hh + h_prev
    return jnp.dot(h, params["w_fc"], precision=hp) + params["b_fc"]


# --------------------------------- main --------------------------------------

if __name__ == "__main__":
    # Small shapes consistent with the module's forward.
    B, S = 2, 8           # batch, sequence length
    V, E = 32, 16         # vocab size, embedding dim (== cell input_size)
    H, C = 32, 10         # hidden size, num classes
    DEPTH = 2

    key = jax.random.PRNGKey(0)
    ks = jax.random.split(key, 10)

    params = {
        "embedding": 0.1 * jax.random.normal(ks[0], (V, E), jnp.float32),
        "w_in":      0.1 * jax.random.normal(ks[1], (E, H), jnp.float32),
        "b_in":      0.1 * jax.random.normal(ks[2], (1, H), jnp.float32),
        "w_layers":  0.1 * jax.random.normal(ks[3], (DEPTH, H, H), jnp.float32),
        "b_layers":  0.1 * jax.random.normal(ks[4], (DEPTH, 1, H), jnp.float32),
        "w_gates":   0.1 * jax.random.normal(ks[5], (DEPTH, H, H), jnp.float32),
        "b_gates":   0.1 * jax.random.normal(ks[6], (DEPTH, 1, H), jnp.float32),
        "w_fc":      0.1 * jax.random.normal(ks[7], (H, C), jnp.float32),
        "b_fc":      0.1 * jax.random.normal(ks[8], (1, C), jnp.float32),
    }

    x_tokens = jax.random.randint(ks[9], (B, S), 0, V, dtype=jnp.int32)

    ref = rhn_net_reference(x_tokens, params, depth=DEPTH)

    # f32 MXU path: tight check against the sequential f32 reference.
    out_f32 = jax.block_until_ready(
        rhn_net_forward(x_tokens, params, depth=DEPTH, use_bf16=False))
    assert out_f32.shape == (B, C)
    assert jnp.allclose(out_f32, ref, atol=1e-3, rtol=1e-3), (out_f32, ref)

    # bf16 MXU operands / f32 accumulate (perf path): looser tolerance.
    out_bf16 = jax.block_until_ready(
        rhn_net_forward(x_tokens, params, depth=DEPTH, use_bf16=True))
    assert out_bf16.shape == (B, C)
    assert jnp.allclose(out_bf16, ref, atol=3e-2, rtol=3e-2), (out_bf16, ref)

    print("KERNEL_OK")
</pallas_src>

<mosaic_0001>
module attributes {stable_mosaic.version = 11 : i64} {
  func.func @rhn_kernel(%arg0: i32, %arg1: i32, %arg2: memref<8x8x128xf32, #tpu.memory_space<vmem>>, %arg3: memref<2x128x256xf32, #tpu.memory_space<vmem>>, %arg4: memref<2x1x256xf32, #tpu.memory_space<vmem>>, %arg5: memref<128x128xf32, #tpu.memory_space<vmem>>, %arg6: memref<1x128xf32, #tpu.memory_space<vmem>>, %arg7: memref<8x128xf32, #tpu.memory_space<vmem>>, %arg8: memref<8x128xf32, #tpu.memory_space<vmem>>) attributes {dimension_semantics = [#tpu.dimension_semantics<parallel>, #tpu.dimension_semantics<arbitrary>], iteration_bounds = array<i64: 1, 1>, scalar_prefetch = 0 : i64, scratch_operands = 1 : i64, tpu.core_type = #tpu.core_type<tc>, window_params = [{transform_indices = @transform_0, window_bounds = array<i64: 8, 8, 128>}, {pipeline_mode = #tpu.pipeline_mode<synchronous>, transform_indices = @transform_1, window_bounds = array<i64: 2, 128, 256>}, {pipeline_mode = #tpu.pipeline_mode<synchronous>, transform_indices = @transform_2, window_bounds = array<i64: 2, 1, 256>}, {pipeline_mode = #tpu.pipeline_mode<synchronous>, transform_indices = @transform_3, window_bounds = array<i64: 128, 128>}, {pipeline_mode = #tpu.pipeline_mode<synchronous>, transform_indices = @transform_4, window_bounds = array<i64: 1, 128>}, {transform_indices = @transform_5, window_bounds = array<i64: 8, 128>}]} {
    %c0_i32 = arith.constant 0 : i32
    %0 = arith.cmpi eq, %arg1, %c0_i32 : i32
    %1 = arith.extui %0 : i1 to i32
    %c0_i32_0 = arith.constant 0 : i32
    %2 = arith.cmpi ne, %1, %c0_i32_0 : i32
    scf.if %2 {
      %cst_24 = arith.constant 0.000000e+00 : f32
      %49 = vector.broadcast %cst_24 : f32 to vector<8x128xf32>
      %c0_25 = arith.constant 0 : index
      %c0_26 = arith.constant 0 : index
      %50 = vector.load %arg8[%c0_25, %c0_26] : memref<8x128xf32, #tpu.memory_space<vmem>>, vector<8x128xf32>
      tpu.vector_store %arg8[%c0_25, %c0_26], %49 {strides = array<i32>} : memref<8x128xf32, #tpu.memory_space<vmem>>, vector<8x128xf32>,
    } else {
    }
    %c0 = arith.constant 0 : index
    %c0_1 = arith.constant 0 : index
    %c0_2 = arith.constant 0 : index
    %3 = vector.load %arg2[%c0, %c0_1, %c0_2] : memref<8x8x128xf32, #tpu.memory_space<vmem>>, vector<8x8x128xf32>
    %4 = vector.shape_cast %3 : vector<8x8x128xf32> to vector<64x128xf32>
    %c0_3 = arith.constant 0 : index
    %c0_4 = arith.constant 0 : index
    %c0_5 = arith.constant 0 : index
    %5 = vector.load %arg3[%c0_3, %c0_4, %c0_5] : memref<2x128x256xf32, #tpu.memory_space<vmem>>, vector<1x128x256xf32>
    %6 = vector.shape_cast %5 : vector<1x128x256xf32> to vector<128x256xf32>
    %cst = arith.constant dense<0.000000e+00> : vector<64x256xf32>
    %7 = tpu.matmul %4, %6, %cst {dimension_numbers = #tpu.dot_dimension_numbers<[1], [0], [0], [1], [0, 0, 1, 1], [], []>} : vector<64x128xf32>, vector<128x256xf32>, vector<64x256xf32> -> vector<64x256xf32>
    %c0_6 = arith.constant 0 : index
    %c0_7 = arith.constant 0 : index
    %c0_8 = arith.constant 0 : index
    %8 = vector.load %arg4[%c0_6, %c0_7, %c0_8] : memref<2x1x256xf32, #tpu.memory_space<vmem>>, vector<1x1x256xf32>
    %9 = vector.shape_cast %8 : vector<1x1x256xf32> to vector<1x256xf32>
    %10 = vector.broadcast %9 : vector<1x256xf32> to vector<64x256xf32>
    %11 = arith.addf %7, %10 : vector<64x256xf32>
    %12 = vector.extract_strided_slice %11 {offsets = [0, 0], sizes = [64, 128], strides = [1, 1]} : vector<64x256xf32> to vector<64x128xf32>
    %13 = arith.negf %12 : vector<64x128xf32>
    %14 = math.exp %13 : vector<64x128xf32>
    %cst_9 = arith.constant 1.000000e+00 : f32
    %15 = vector.broadcast %cst_9 : f32 to vector<64x128xf32>
    %16 = arith.addf %15, %14 : vector<64x128xf32>
    %17 = arith.divf %15, %16 : vector<64x128xf32>
    %18 = vector.extract_strided_slice %11 {offsets = [0, 128], sizes = [64, 128], strides = [1, 1]} : vector<64x256xf32> to vector<64x128xf32>
    %19 = math.tanh %18 : vector<64x128xf32>
    %20 = arith.subf %19, %4 : vector<64x128xf32>
    %21 = arith.mulf %17, %20 : vector<64x128xf32>
    %22 = arith.addf %4, %21 : vector<64x128xf32>
    %c1 = arith.constant 1 : index
    %c0_10 = arith.constant 0 : index
    %c0_11 = arith.constant 0 : index
    %23 = vector.load %arg3[%c1, %c0_10, %c0_11] : memref<2x128x256xf32, #tpu.memory_space<vmem>>, vector<1x128x256xf32>
    %24 = vector.shape_cast %23 : vector<1x128x256xf32> to vector<128x256xf32>
    %cst_12 = arith.constant dense<0.000000e+00> : vector<64x256xf32>
    %25 = tpu.matmul %22, %24, %cst_12 {dimension_numbers = #tpu.dot_dimension_numbers<[1], [0], [0], [1], [0, 0, 1, 1], [], []>} : vector<64x128xf32>, vector<128x256xf32>, vector<64x256xf32> -> vector<64x256xf32>
    %c1_13 = arith.constant 1 : index
    %c0_14 = arith.constant 0 : index
    %c0_15 = arith.constant 0 : index
    %26 = vector.load %arg4[%c1_13, %c0_14, %c0_15] : memref<2x1x256xf32, #tpu.memory_space<vmem>>, vector<1x1x256xf32>
    %27 = vector.shape_cast %26 : vector<1x1x256xf32> to vector<1x256xf32>
    %28 = vector.broadcast %27 : vector<1x256xf32> to vector<64x256xf32>
    %29 = arith.addf %25, %28 : vector<64x256xf32>
    %30 = vector.extract_strided_slice %29 {offsets = [0, 0], sizes = [64, 128], strides = [1, 1]} : vector<64x256xf32> to vector<64x128xf32>
    %31 = arith.negf %30 : vector<64x128xf32>
    %32 = math.exp %31 : vector<64x128xf32>
    %cst_16 = arith.constant 1.000000e+00 : f32
    %33 = vector.broadcast %cst_16 : f32 to vector<64x128xf32>
    %34 = arith.addf %33, %32 : vector<64x128xf32>
    %35 = arith.divf %33, %34 : vector<64x128xf32>
    %36 = vector.extract_strided_slice %29 {offsets = [0, 128], sizes = [64, 128], strides = [1, 1]} : vector<64x256xf32> to vector<64x128xf32>
    %37 = math.tanh %36 : vector<64x128xf32>
    %38 = arith.subf %37, %22 : vector<64x128xf32>
    %39 = arith.mulf %35, %38 : vector<64x128xf32>
    %40 = arith.addf %22, %39 : vector<64x128xf32>
    %41 = vector.shape_cast %40 : vector<64x128xf32> to vector<8x8x128xf32>
    %c0_17 = arith.constant 0 : index
    %c0_18 = arith.constant 0 : index
    %42 = vector.load %arg8[%c0_17, %c0_18] : memref<8x128xf32, #tpu.memory_space<vmem>>, vector<8x128xf32>
    %cst_19 = arith.constant dense<0.000000e+00> : vector<8x128xf32>
    %43 = vector.multi_reduction <add>, %41, %cst_19 [0] : vector<8x8x128xf32> to vector<8x128xf32>
    %44 = arith.addf %42, %43 : vector<8x128xf32>
    %c0_20 = arith.constant 0 : index
    %c0_21 = arith.constant 0 : index
    %45 = vector.load %arg8[%c0_20, %c0_21] : memref<8x128xf32, #tpu.memory_space<vmem>>, vector<8x128xf32>
    tpu.vector_store %arg8[%c0_20, %c0_21], %44 {strides = array<i32>} : memref<8x128xf32, #tpu.memory_space<vmem>>, vector<8x128xf32>,
    %c0_i32_22 = arith.constant 0 : i32
    %46 = arith.cmpi eq, %arg1, %c0_i32_22 : i32
    %47 = arith.extui %46 : i1 to i32
    %c0_i32_23 = arith.constant 0 : i32
    %48 = arith.cmpi ne, %47, %c0_i32_23 : i32
    scf.if %48 {
      %c0_24 = arith.constant 0 : index
      %c0_25 = arith.constant 0 : index
      %49 = vector.load %arg8[%c0_24, %c0_25] : memref<8x128xf32, #tpu.memory_space<vmem>>, vector<8x128xf32>
      %c0_26 = arith.constant 0 : index
      %c0_27 = arith.constant 0 : index
      %50 = vector.load %arg5[%c0_26, %c0_27] : memref<128x128xf32, #tpu.memory_space<vmem>>, vector<128x128xf32>
      %cst_28 = arith.constant dense<0.000000e+00> : vector<8x128xf32>
      %51 = tpu.matmul %49, %50, %cst_28 {dimension_numbers = #tpu.dot_dimension_numbers<[1], [0], [0], [1], [0, 0, 1, 1], [], []>} : vector<8x128xf32>, vector<128x128xf32>, vector<8x128xf32> -> vector<8x128xf32>
      %c0_29 = arith.constant 0 : index
      %c0_30 = arith.constant 0 : index
      %52 = vector.load %arg6[%c0_29, %c0_30] : memref<1x128xf32, #tpu.memory_space<vmem>>, vector<1x128xf32>
      %53 = vector.broadcast %52 : vector<1x128xf32> to vector<8x128xf32>
      %54 = arith.addf %51, %53 : vector<8x128xf32>
      %c0_31 = arith.constant 0 : index
      %c0_32 = arith.constant 0 : index
      %55 = vector.load %arg7[%c0_31, %c0_32] : memref<8x128xf32, #tpu.memory_space<vmem>>, vector<8x128xf32>
      tpu.vector_store %arg7[%c0_31, %c0_32], %54 {strides = array<i32>} : memref<8x128xf32, #tpu.memory_space<vmem>>, vector<8x128xf32>,
    } else {
    }
    return
  }
  func.func @transform_0(%arg0: i32, %arg1: i32) -> (i32, i32, i32) {
    %c0_i32 = arith.constant 0 : i32
    %c0_i32_0 = arith.constant 0 : i32
    return %arg1, %arg0, %c0_i32 : i32, i32, i32
  }
  func.func @transform_1(%arg0: i32, %arg1: i32) -> (i32, i32, i32) {
    %c0_i32 = arith.constant 0 : i32
    %c0_i32_0 = arith.constant 0 : i32
    %c0_i32_1 = arith.constant 0 : i32
    %c0_i32_2 = arith.constant 0 : i32
    return %c0_i32, %c0_i32_0, %c0_i32_1 : i32, i32, i32
  }
  func.func @transform_2(%arg0: i32, %arg1: i32) -> (i32, i32, i32) {
    %c0_i32 = arith.constant 0 : i32
    %c0_i32_0 = arith.constant 0 : i32
    %c0_i32_1 = arith.constant 0 : i32
    %c0_i32_2 = arith.constant 0 : i32
    return %c0_i32, %c0_i32_0, %c0_i32_1 : i32, i32, i32
  }
  func.func @transform_3(%arg0: i32, %arg1: i32) -> (i32, i32) {
    %c0_i32 = arith.constant 0 : i32
    %c0_i32_0 = arith.constant 0 : i32
    %c0_i32_1 = arith.constant 0 : i32
    return %c0_i32, %c0_i32_0 : i32, i32
  }
  func.func @transform_4(%arg0: i32, %arg1: i32) -> (i32, i32) {
    %c0_i32 = arith.constant 0 : i32
    %c0_i32_0 = arith.constant 0 : i32
    %c0_i32_1 = arith.constant 0 : i32
    return %c0_i32, %c0_i32_0 : i32, i32
  }
  func.func @transform_5(%arg0: i32, %arg1: i32) -> (i32, i32) {
    %c0_i32 = arith.constant 0 : i32
    %c0_i32_0 = arith.constant 0 : i32
    return %arg0, %c0_i32 : i32, i32
  }
}

</mosaic_0001>

<llo_original>
// kernel: tpu_custom_call.1
$region0: #{tpu_custom_call.1}
  #allocation0 [shape = 'u32[]', space=smem, size = 0x4, offset = 0x4, fixed_abs, tag = 'smem constant byte address 0x4 - core index']
  #allocation1 [shape = 'u32[144,128]{1,0:T(1,128)}', space=vmem, size = 0x12000, scoped, tag = 'internal scratch']
  #allocation2 [shape = 'f32[8,128]{1,0:T(8,128)}', space=vmem, size = 0x1000, scoped, tag = 'scratch operand']
  %s0 = inlined_call_operand.hbm [shape: f32[8,8,128], index: 0, kind: input, shape index: {}]
  %s1 = inlined_call_operand.hbm [shape: f32[2,128,256], index: 1, kind: input, shape index: {}]
  %s2 = inlined_call_operand.vmem [shape: f32[2,1,256], index: 2, kind: input, shape index: {}]
  %s3 = inlined_call_operand.hbm [shape: f32[128,128], index: 3, kind: input, shape index: {}]
  %s4 = inlined_call_operand.vmem [shape: f32[1,128], index: 4, kind: input, shape index: {}]
  %s5 = inlined_call_operand.hbm [shape: f32[8,128], index: 5, kind: output, shape index: {}]
  %s6 = sld [smem:[#allocation0]]
  $region50: #{tpu_custom_call.1} parent=0
    _
  %s8 = ssub.s32 1, %s6
  %s9 = scalar_select 0, %s8, %s6
  $region1: #{tpu_custom_call.1} parent=0
    #allocation3 [shape = 'u8[32768]{0}', space=vmem, size = 0x8000, scoped, tag = 'input window, operand 0, single buffered']
    #allocation4 [shape = 's32[1]{0}', space=sflag, size = 0x4, scoped, tag = 'scoped memory for tpu_custom_call.1']
    #allocation5 [shape = 's32[1]{0}', space=sflag, size = 0x4, scoped, tag = 'scoped memory for tpu_custom_call.1']
    #allocation6 [shape = 'u8[262144]{0}', space=vmem, size = 0x40000, scoped, tag = 'input window, operand 1, single buffered']
    #allocation7 [shape = 's32[1]{0}', space=sflag, size = 0x4, scoped, tag = 'scoped memory for tpu_custom_call.1']
    #allocation8 [shape = 'u8[65536]{0}', space=vmem, size = 0x10000, scoped, tag = 'input window, operand 3, single buffered']
    #allocation9 [shape = 'u8[4096]{0}', space=vmem, size = 0x1000, scoped, tag = 'output window, operand 0, single buffered']
    %10 = vsyncpa [#allocation4], 0
    %11 = vsyncpa [#allocation7], 0
    %12 = vsyncpa [#allocation5], 0
    // Predicated region
    $region2: #{tpu_custom_call.1} parent=1 // pred_check
      _
    $region3: #{tpu_custom_call.1} parent=1 // pred_check_branch
      %14 = sbr.rel (0) target = $region5
    $region4: #{tpu_custom_call.1} parent=1 // pred_region
      %s16 = ssub.s32 1024, 1024
      %17 = vsyncadd [#allocation4], %s16
      %s18 = sshll.u32 [#allocation3], 4
      %s19 = int_to_ptr.vmem [resolvable:$true] %s18
      %24 = dma.hbm_to_vmem [thread:$0]  %s0, 1024, %s19, [#allocation4], 128, 128, 8
    $region5: #{tpu_custom_call.1} parent=1 // pred_fallthru
      _
    // Predicated region
    $region6: #{tpu_custom_call.1} parent=1 // pred_check
      _
    $region7: #{tpu_custom_call.1} parent=1 // pred_check_branch
      %26 = sbr.rel (0) target = $region9
    $region8: #{tpu_custom_call.1} parent=1 // pred_region
      %s28 = ssub.s32 8192, 8192
      %29 = vsyncadd [#allocation7], %s28
      %s30 = sshll.u32 [#allocation6], 4
      %s31 = int_to_ptr.vmem [resolvable:$true] %s30
      %36 = dma.hbm_to_vmem [thread:$0]  %s1, 8192, %s31, [#allocation7], 256, 256, 16
    $region9: #{tpu_custom_call.1} parent=1 // pred_fallthru
      _
    // Predicated region
    $region10: #{tpu_custom_call.1} parent=1 // pred_check
      _
    $region11: #{tpu_custom_call.1} parent=1 // pred_check_branch
      %38 = sbr.rel (0) target = $region13
    $region12: #{tpu_custom_call.1} parent=1 // pred_region
      _
    $region13: #{tpu_custom_call.1} parent=1 // pred_fallthru
      _
    // Predicated region
    $region14: #{tpu_custom_call.1} parent=1 // pred_check
      _
    $region15: #{tpu_custom_call.1} parent=1 // pred_check_branch
      %40 = sbr.rel (0) target = $region17
    $region16: #{tpu_custom_call.1} parent=1 // pred_region
      %s42 = ssub.s32 2048, 2048
      %43 = vsyncadd [#allocation7], %s42
      %s44 = sshll.u32 [#allocation8], 4
      %s45 = int_to_ptr.vmem [resolvable:$true] %s44
      %50 = dma.hbm_to_vmem [thread:$0]  %s3, 2048, %s45, [#allocation7], 128, 128, 8
    $region17: #{tpu_custom_call.1} parent=1 // pred_fallthru
      _
    // Predicated region
    $region18: #{tpu_custom_call.1} parent=1 // pred_check
      _
    $region19: #{tpu_custom_call.1} parent=1 // pred_check_branch
      %52 = sbr.rel (0) target = $region21
    $region20: #{tpu_custom_call.1} parent=1 // pred_region
      _
    $region21: #{tpu_custom_call.1} parent=1 // pred_fallthru
      _
    // Predicated region
    $region22: #{tpu_custom_call.1} parent=1 // pred_check
      _
    $region23: #{tpu_custom_call.1} parent=1 // pred_check_branch
      %54 = sbr.rel (0) target = $region25
    $region24: #{tpu_custom_call.1} parent=1 // pred_region
      %55 = dma.done [#allocation4], 1024
    $region25: #{tpu_custom_call.1} parent=1 // pred_fallthru
      _
    // Predicated region
    $region26: #{tpu_custom_call.1} parent=1 // pred_check
      _
    $region27: #{tpu_custom_call.1} parent=1 // pred_check_branch
      %57 = sbr.rel (0) target = $region29
    $region28: #{tpu_custom_call.1} parent=1 // pred_region
      %58 = dma.done [#allocation7], 8192
    $region29: #{tpu_custom_call.1} parent=1 // pred_fallthru
      _
    // Predicated region
    $region30: #{tpu_custom_call.1} parent=1 // pred_check
      _
    $region31: #{tpu_custom_call.1} parent=1 // pred_check_branch
      %60 = sbr.rel (0) target = $region33
    $region32: #{tpu_custom_call.1} parent=1 // pred_region
      %61 = dma.done [#allocation7], 2048
    $region33: #{tpu_custom_call.1} parent=1 // pred_fallthru
      _
    %p62 = scmp.eq.s32.totalorder 0, 0
    // Predicated region
    $region34: #{tpu_custom_call.1} parent=1 // pred_check
      %p63 = pneg %p62
    $region35: #{tpu_custom_call.1} parent=1 // pred_check_branch
      %65 = sbr.rel (%p63) target = $region37
    $region36: #{tpu_custom_call.1} parent=1 // pred_region
      %66 = vst [vmem:[#allocation2] sm:$0xff] 0.0
    $region37: #{tpu_custom_call.1} parent=1 // pred_fallthru
      _
    %v67 = vld [vmem:[#allocation3] sm:$0xff]
    %v68 = vld [vmem:[#allocation3 + $0x8] sm:$0xff]
    %v69 = vld [vmem:[#allocation3 + $0x10] sm:$0xff]
    %v70 = vld [vmem:[#allocation3 + $0x18] sm:$0xff]
    %v71 = vld [vmem:[#allocation3 + $0x20] sm:$0xff]
    %v72 = vld [vmem:[#allocation3 + $0x28] sm:$0xff]
    %v73 = vld [vmem:[#allocation3 + $0x30] sm:$0xff]
    %v74 = vld [vmem:[#allocation3 + $0x38] sm:$0xff]
    %v75 = vld [vmem:[#allocation6] sm:$0xff]
    %v76 = vld [vmem:[#allocation6 + $0x8] sm:$0xff]
    %v77 = vld [vmem:[#allocation6 + $0x10] sm:$0xff]
    %v78 = vld [vmem:[#allocation6 + $0x18] sm:$0xff]
    %v79 = vld [vmem:[#allocation6 + $0x20] sm:$0xff]
    %v80 = vld [vmem:[#allocation6 + $0x28] sm:$0xff]
    %v81 = vld [vmem:[#allocation6 + $0x30] sm:$0xff]
    %v82 = vld [vmem:[#allocation6 + $0x38] sm:$0xff]
    %v83 = vld [vmem:[#allocation6 + $0x40] sm:$0xff]
    %v84 = vld [vmem:[#allocation6 + $0x48] sm:$0xff]
    %v85 = vld [vmem:[#allocation6 + $0x50] sm:$0xff]
    %v86 = vld [vmem:[#allocation6 + $0x58] sm:$0xff]
    %v87 = vld [vmem:[#allocation6 + $0x60] sm:$0xff]
    %v88 = vld [vmem:[#allocation6 + $0x68] sm:$0xff]
    %v89 = vld [vmem:[#allocation6 + $0x70] sm:$0xff]
    %v90 = vld [vmem:[#allocation6 + $0x78] sm:$0xff]
    %v91 = vld [vmem:[#allocation6 + $0x80] sm:$0xff]
    %v92 = vld [vmem:[#allocation6 + $0x88] sm:$0xff]
    %v93 = vld [vmem:[#allocation6 + $0x90] sm:$0xff]
    %v94 = vld [vmem:[#allocation6 + $0x98] sm:$0xff]
    %v95 = vld [vmem:[#allocation6 + $0xa0] sm:$0xff]
    %v96 = vld [vmem:[#allocation6 + $0xa8] sm:$0xff]
    %v97 = vld [vmem:[#allocation6 + $0xb0] sm:$0xff]
    %v98 = vld [vmem:[#allocation6 + $0xb8] sm:$0xff]
    %v99 = vld [vmem:[#allocation6 + $0xc0] sm:$0xff]
    %v100 = vld [vmem:[#allocation6 + $0xc8] sm:$0xff]
    %v101 = vld [vmem:[#allocation6 + $0xd0] sm:$0xff]
    %v102 = vld [vmem:[#allocation6 + $0xd8] sm:$0xff]
    %v103 = vld [vmem:[#allocation6 + $0xe0] sm:$0xff]
    %v104 = vld [vmem:[#allocation6 + $0xe8] sm:$0xff]
    %v105 = vld [vmem:[#allocation6 + $0xf0] sm:$0xff]
    %v106 = vld [vmem:[#allocation6 + $0xf8] sm:$0xff]
    %v107 = vld [vmem:[%s2] sm:$0x3]
    %v109 = vlaneseq
    %v110 = vshrl.u32 %v109, 7
    %v111 = vsub.s32 0, %v110
    %v112 = vrot.slane %v107, %v111
    %v113 = vlaneseq
    %v114 = vshrl.u32 %v113, 7
    %v115 = vsub.s32 1, %v114
    %v116 = vrot.slane %v107, %v115
    %119 = vmatprep.subr.mxu0 %v76
    %120 = vmatpush1.msra.mxu0 %v75
    %121 = vmatprep.subr.mxu0 %v78
    %122 = vmatpush1.msra.mxu0 %v77
    %123 = vmatprep.subr.mxu0 %v80
    %124 = vmatpush1.msra.mxu0 %v79
    %125 = vmatprep.subr.mxu0 %v82
    %126 = vmatpush1.msra.mxu0 %v81
    %127 = vmatprep.subr.mxu0 %v84
    %128 = vmatpush1.msra.mxu0 %v83
    %129 = vmatprep.subr.mxu0 %v86
    %130 = vmatpush1.msra.mxu0 %v85
    %131 = vmatprep.subr.mxu0 %v88
    %132 = vmatpush1.msra.mxu0 %v87
    %133 = vmatprep.subr.mxu0 %v90
    %134 = vmatpush1.msra.mxu0 %v89
    %135 = vmatprep.subr.mxu0 %v92
    %136 = vmatpush1.msra.mxu0 %v91
    %137 = vmatprep.subr.mxu0 %v94
    %138 = vmatpush1.msra.mxu0 %v93
    %139 = vmatprep.subr.mxu0 %v96
    %140 = vmatpush1.msra.mxu0 %v95
    %141 = vmatprep.subr.mxu0 %v98
    %142 = vmatpush1.msra.mxu0 %v97
    %143 = vmatprep.subr.mxu0 %v100
    %144 = vmatpush1.msra.mxu0 %v99
    %145 = vmatprep.subr.mxu0 %v102
    %146 = vmatpush1.msra.mxu0 %v101
    %147 = vmatprep.subr.mxu0 %v104
    %148 = vmatpush1.msra.mxu0 %v103
    %149 = vmatprep.subr.mxu0 %v106
    %150 = vmatpush1.msra.mxu0 %v105
    %151 = vmatprep.subr.mxu0 0.0
    %152 = vmatpush1.msra.mxu0 0.0
    %153 = vmatprep.subr.mxu0 0.0
    %154 = vmatpush1.msra.mxu0 0.0
    %155 = vmatprep.subr.mxu0 0.0
    %156 = vmatpush1.msra.mxu0 0.0
    %157 = vmatprep.subr.mxu0 0.0
    %158 = vmatpush1.msra.mxu0 0.0
    %159 = vmatprep.subr.mxu0 0.0
    %160 = vmatpush1.msra.mxu0 0.0
    %161 = vmatprep.subr.mxu0 0.0
    %162 = vmatpush1.msra.mxu0 0.0
    %163 = vmatprep.subr.mxu0 0.0
    %164 = vmatpush1.msra.mxu0 0.0
    %165 = vmatprep.subr.mxu0 0.0
    %166 = vmatpush1.msra.mxu0 0.0
    %167 = vmatprep.subr.mxu0 0.0
    %168 = vmatpush1.msra.mxu0 0.0
    %169 = vmatprep.subr.mxu0 0.0
    %170 = vmatpush1.msra.mxu0 0.0
    %171 = vmatprep.subr.mxu0 0.0
    %172 = vmatpush1.msra.mxu0 0.0
    %173 = vmatprep.subr.mxu0 0.0
    %174 = vmatpush1.msra.mxu0 0.0
    %175 = vmatprep.subr.mxu0 0.0
    %176 = vmatpush1.msra.mxu0 0.0
    %177 = vmatprep.subr.mxu0 0.0
    %178 = vmatpush1.msra.mxu0 0.0
    %179 = vmatprep.subr.mxu0 0.0
    %180 = vmatpush1.msra.mxu0 0.0
    %181 = vmatprep.subr.mxu0 0.0
    %182 = vmatpush1.msra.mxu0 0.0
    %183 = vmatprep.mubr.f32.mxu0 0.0
    %184 = vmatmul.mubr.f32.gmra.mrb[0].mxu0 %v67
    %v185 = vpop.f32.mrb[0].mxu0
    %v186 = vadd.f32 %v112, %v185
    %v187 = vpop.f32.mrb[0].mxu0
    %v188 = vadd.f32 %v116, %v187
    %189 = vmatprep.mubr.f32.mxu0 0.0
    %190 = vmatmul.mubr.f32.gmra.mrb[0].mxu0 %v68
    %v191 = vpop.f32.mrb[0].mxu0
    %v192 = vadd.f32 %v112, %v191
    %v193 = vpop.f32.mrb[0].mxu0
    %v194 = vadd.f32 %v116, %v193
    %195 = vmatprep.mubr.f32.mxu0 0.0
    %196 = vmatmul.mubr.f32.gmra.mrb[0].mxu0 %v69
    %v197 = vpop.f32.mrb[0].mxu0
    %v198 = vadd.f32 %v112, %v197
    %v199 = vpop.f32.mrb[0].mxu0
    %v200 = vadd.f32 %v116, %v199
    %201 = vmatprep.mubr.f32.mxu0 0.0
    %202 = vmatmul.mubr.f32.gmra.mrb[0].mxu0 %v70
    %v203 = vpop.f32.mrb[0].mxu0
    %v204 = vadd.f32 %v112, %v203
    %v205 = vpop.f32.mrb[0].mxu0
    %v206 = vadd.f32 %v116, %v205
    %207 = vmatprep.mubr.f32.mxu0 0.0
    %208 = vmatmul.mubr.f32.gmra.mrb[0].mxu0 %v71
    %v209 = vpop.f32.mrb[0].mxu0
    %v210 = vadd.f32 %v112, %v209
    %v211 = vpop.f32.mrb[0].mxu0
    %v212 = vadd.f32 %v116, %v211
    %213 = vmatprep.mubr.f32.mxu0 0.0
    %214 = vmatmul.mubr.f32.gmra.mrb[0].mxu0 %v72
    %v215 = vpop.f32.mrb[0].mxu0
    %v216 = vadd.f32 %v112, %v215
    %v217 = vpop.f32.mrb[0].mxu0
    %v218 = vadd.f32 %v116, %v217
    %219 = vmatprep.mubr.f32.mxu0 0.0
    %220 = vmatmul.mubr.f32.gmra.mrb[0].mxu0 %v73
    %v221 = vpop.f32.mrb[0].mxu0
    %v222 = vadd.f32 %v112, %v221
    %v223 = vpop.f32.mrb[0].mxu0
    %v224 = vadd.f32 %v116, %v223
    %225 = vmatprep.mubr.f32.mxu0 0.0
    %226 = vmatmul.mubr.f32.gmra.mrb[0].mxu0 %v74
    %v227 = vpop.f32.mrb[0].mxu0
    %v228 = vadd.f32 %v112, %v227
    %v229 = vpop.f32.mrb[0].mxu0
    %v230 = vadd.f32 %v116, %v229
    %231 = vdwg.mxu0
    %v232 = vxor.u32 %v186, 2147483648
    %v233 = vxor.u32 %v192, 2147483648
    %v234 = vxor.u32 %v198, 2147483648
    %v235 = vxor.u32 %v204, 2147483648
    %v236 = vxor.u32 %v210, 2147483648
    %v237 = vxor.u32 %v216, 2147483648
    %v238 = vxor.u32 %v222, 2147483648
    %v239 = vxor.u32 %v228, 2147483648
    %v240 = vmul.f32 %v232, 1.442695
    %v241 = vpow.pop %v240
    %v242 = vmul.f32 %v233, 1.442695
    %v243 = vpow.pop %v242
    %v244 = vmul.f32 %v234, 1.442695
    %v245 = vpow.pop %v244
    %v246 = vmul.f32 %v235, 1.442695
    %v247 = vpow.pop %v246
    %v248 = vmul.f32 %v236, 1.442695
    %v249 = vpow.pop %v248
    %v250 = vmul.f32 %v237, 1.442695
    %v251 = vpow.pop %v250
    %v252 = vmul.f32 %v238, 1.442695
    %v253 = vpow.pop %v252
    %v254 = vmul.f32 %v239, 1.442695
    %v255 = vpow.pop %v254
    %v256 = vadd.f32 %v241, 1.0
    %v257 = vadd.f32 %v243, 1.0
    %v258 = vadd.f32 %v245, 1.0
    %v259 = vadd.f32 %v247, 1.0
    %v260 = vadd.f32 %v249, 1.0
    %v261 = vadd.f32 %v251, 1.0
    %v262 = vadd.f32 %v253, 1.0
    %v263 = vadd.f32 %v255, 1.0
    %v264 = vrcp.pop %v256
    %v265 = vmul.f32 1.0, %v264
    %v266 = vrcp.pop %v257
    %v267 = vmul.f32 1.0, %v266
    %v268 = vrcp.pop %v258
    %v269 = vmul.f32 1.0, %v268
    %v270 = vrcp.pop %v259
    %v271 = vmul.f32 1.0, %v270
    %v272 = vrcp.pop %v260
    %v273 = vmul.f32 1.0, %v272
    %v274 = vrcp.pop %v261
    %v275 = vmul.f32 1.0, %v274
    %v276 = vrcp.pop %v262
    %v277 = vmul.f32 1.0, %v276
    %v278 = vrcp.pop %v263
    %v279 = vmul.f32 1.0, %v278
    %v280 = vtanh.pop %v188
    %v281 = vtanh.pop %v194
    %v282 = vtanh.pop %v200
    %v283 = vtanh.pop %v206
    %v284 = vtanh.pop %v212
    %v285 = vtanh.pop %v218
    %v286 = vtanh.pop %v224
    %v287 = vtanh.pop %v230
    %v288 = vsub.f32 %v280, %v67
    %v289 = vsub.f32 %v281, %v68
    %v290 = vsub.f32 %v282, %v69
    %v291 = vsub.f32 %v283, %v70
    %v292 = vsub.f32 %v284, %v71
    %v293 = vsub.f32 %v285, %v72
    %v294 = vsub.f32 %v286, %v73
    %v295 = vsub.f32 %v287, %v74
    %v296 = vmul.f32 %v265, %v288
    %v297 = vmul.f32 %v267, %v289
    %v298 = vmul.f32 %v269, %v290
    %v299 = vmul.f32 %v271, %v291
    %v300 = vmul.f32 %v273, %v292
    %v301 = vmul.f32 %v275, %v293
    %v302 = vmul.f32 %v277, %v294
    %v303 = vmul.f32 %v279, %v295
    %v304 = vadd.f32 %v67, %v296
    %v305 = vadd.f32 %v68, %v297
    %v306 = vadd.f32 %v69, %v298
    %v307 = vadd.f32 %v70, %v299
    %v308 = vadd.f32 %v71, %v300
    %v309 = vadd.f32 %v72, %v301
    %v310 = vadd.f32 %v73, %v302
    %v311 = vadd.f32 %v74, %v303
    %s312 = scalar_lea.vmem [#allocation6], 256
    %v313 = vld [vmem:[%s312] sm:$0xff]
    %v314 = vld [vmem:[%s312 + $0x8] sm:$0xff]
    %v315 = vld [vmem:[%s312 + $0x10] sm:$0xff]
    %v316 = vld [vmem:[%s312 + $0x18] sm:$0xff]
    %v317 = vld [vmem:[%s312 + $0x20] sm:$0xff]
    %v318 = vld [vmem:[%s312 + $0x28] sm:$0xff]
    %v319 = vld [vmem:[%s312 + $0x30] sm:$0xff]
    %v320 = vld [vmem:[%s312 + $0x38] sm:$0xff]
    %v321 = vld [vmem:[%s312 + $0x40] sm:$0xff]
    %v322 = vld [vmem:[%s312 + $0x48] sm:$0xff]
    %v323 = vld [vmem:[%s312 + $0x50] sm:$0xff]
    %v324 = vld [vmem:[%s312 + $0x58] sm:$0xff]
    %v325 = vld [vmem:[%s312 + $0x60] sm:$0xff]
    %v326 = vld [vmem:[%s312 + $0x68] sm:$0xff]
    %v327 = vld [vmem:[%s312 + $0x70] sm:$0xff]
    %v328 = vld [vmem:[%s312 + $0x78] sm:$0xff]
    %v329 = vld [vmem:[%s312 + $0x80] sm:$0xff]
    %v330 = vld [vmem:[%s312 + $0x88] sm:$0xff]
    %v331 = vld [vmem:[%s312 + $0x90] sm:$0xff]
    %v332 = vld [vmem:[%s312 + $0x98] sm:$0xff]
    %v333 = vld [vmem:[%s312 + $0xa0] sm:$0xff]
    %v334 = vld [vmem:[%s312 + $0xa8] sm:$0xff]
    %v335 = vld [vmem:[%s312 + $0xb0] sm:$0xff]
    %v336 = vld [vmem:[%s312 + $0xb8] sm:$0xff]
    %v337 = vld [vmem:[%s312 + $0xc0] sm:$0xff]
    %v338 = vld [vmem:[%s312 + $0xc8] sm:$0xff]
    %v339 = vld [vmem:[%s312 + $0xd0] sm:$0xff]
    %v340 = vld [vmem:[%s312 + $0xd8] sm:$0xff]
    %v341 = vld [vmem:[%s312 + $0xe0] sm:$0xff]
    %v342 = vld [vmem:[%s312 + $0xe8] sm:$0xff]
    %v343 = vld [vmem:[%s312 + $0xf0] sm:$0xff]
    %v344 = vld [vmem:[%s312 + $0xf8] sm:$0xff]
    %s345 = scalar_lea.vmem %s2, 2
    %v346 = vld [vmem:[%s345] sm:$0x3]
    %v348 = vlaneseq
    %v349 = vshrl.u32 %v348, 7
    %v350 = vsub.s32 0, %v349
    %v351 = vrot.slane %v346, %v350
    %v352 = vlaneseq
    %v353 = vshrl.u32 %v352, 7
    %v354 = vsub.s32 1, %v353
    %v355 = vrot.slane %v346, %v354
    %358 = vmatprep.subr.mxu0 %v314
    %359 = vmatpush1.msra.mxu0 %v313
    %360 = vmatprep.subr.mxu0 %v316
    %361 = vmatpush1.msra.mxu0 %v315
    %362 = vmatprep.subr.mxu0 %v318
    %363 = vmatpush1.msra.mxu0 %v317
    %364 = vmatprep.subr.mxu0 %v320
    %365 = vmatpush1.msra.mxu0 %v319
    %366 = vmatprep.subr.mxu0 %v322
    %367 = vmatpush1.msra.mxu0 %v321
    %368 = vmatprep.subr.mxu0 %v324
    %369 = vmatpush1.msra.mxu0 %v323
    %370 = vmatprep.subr.mxu0 %v326
    %371 = vmatpush1.msra.mxu0 %v325
    %372 = vmatprep.subr.mxu0 %v328
    %373 = vmatpush1.msra.mxu0 %v327
    %374 = vmatprep.subr.mxu0 %v330
    %375 = vmatpush1.msra.mxu0 %v329
    %376 = vmatprep.subr.mxu0 %v332
    %377 = vmatpush1.msra.mxu0 %v331
    %378 = vmatprep.subr.mxu0 %v334
    %379 = vmatpush1.msra.mxu0 %v333
    %380 = vmatprep.subr.mxu0 %v336
    %381 = vmatpush1.msra.mxu0 %v335
    %382 = vmatprep.subr.mxu0 %v338
    %383 = vmatpush1.msra.mxu0 %v337
    %384 = vmatprep.subr.mxu0 %v340
    %385 = vmatpush1.msra.mxu0 %v339
    %386 = vmatprep.subr.mxu0 %v342
    %387 = vmatpush1.msra.mxu0 %v341
    %388 = vmatprep.subr.mxu0 %v344
    %389 = vmatpush1.msra.mxu0 %v343
    %390 = vmatprep.subr.mxu0 0.0
    %391 = vmatpush1.msra.mxu0 0.0
    %392 = vmatprep.subr.mxu0 0.0
    %393 = vmatpush1.msra.mxu0 0.0
    %394 = vmatprep.subr.mxu0 0.0
    %395 = vmatpush1.msra.mxu0 0.0
    %396 = vmatprep.subr.mxu0 0.0
    %397 = vmatpush1.msra.mxu0 0.0
    %398 = vmatprep.subr.mxu0 0.0
    %399 = vmatpush1.msra.mxu0 0.0
    %400 = vmatprep.subr.mxu0 0.0
    %401 = vmatpush1.msra.mxu0 0.0
    %402 = vmatprep.subr.mxu0 0.0
    %403 = vmatpush1.msra.mxu0 0.0
    %404 = vmatprep.subr.mxu0 0.0
    %405 = vmatpush1.msra.mxu0 0.0
    %406 = vmatprep.subr.mxu0 0.0
    %407 = vmatpush1.msra.mxu0 0.0
    %408 = vmatprep.subr.mxu0 0.0
    %409 = vmatpush1.msra.mxu0 0.0
    %410 = vmatprep.subr.mxu0 0.0
    %411 = vmatpush1.msra.mxu0 0.0
    %412 = vmatprep.subr.mxu0 0.0
    %413 = vmatpush1.msra.mxu0 0.0
    %414 = vmatprep.subr.mxu0 0.0
    %415 = vmatpush1.msra.mxu0 0.0
    %416 = vmatprep.subr.mxu0 0.0
    %417 = vmatpush1.msra.mxu0 0.0
    %418 = vmatprep.subr.mxu0 0.0
    %419 = vmatpush1.msra.mxu0 0.0
    %420 = vmatprep.subr.mxu0 0.0
    %421 = vmatpush1.msra.mxu0 0.0
    %422 = vmatprep.mubr.f32.mxu0 0.0
    %423 = vmatmul.mubr.f32.gmra.mrb[0].mxu0 %v304
    %v424 = vpop.f32.mrb[0].mxu0
    %v425 = vadd.f32 %v351, %v424
    %v426 = vpop.f32.mrb[0].mxu0
    %v427 = vadd.f32 %v355, %v426
    %428 = vmatprep.mubr.f32.mxu0 0.0
    %429 = vmatmul.mubr.f32.gmra.mrb[0].mxu0 %v305
    %v430 = vpop.f32.mrb[0].mxu0
    %v431 = vadd.f32 %v351, %v430
    %v432 = vpop.f32.mrb[0].mxu0
    %v433 = vadd.f32 %v355, %v432
    %434 = vmatprep.mubr.f32.mxu0 0.0
    %435 = vmatmul.mubr.f32.gmra.mrb[0].mxu0 %v306
    %v436 = vpop.f32.mrb[0].mxu0
    %v437 = vadd.f32 %v351, %v436
    %v438 = vpop.f32.mrb[0].mxu0
    %v439 = vadd.f32 %v355, %v438
    %440 = vmatprep.mubr.f32.mxu0 0.0
    %441 = vmatmul.mubr.f32.gmra.mrb[0].mxu0 %v307
    %v442 = vpop.f32.mrb[0].mxu0
    %v443 = vadd.f32 %v351, %v442
    %v444 = vpop.f32.mrb[0].mxu0
    %v445 = vadd.f32 %v355, %v444
    %446 = vmatprep.mubr.f32.mxu0 0.0
    %447 = vmatmul.mubr.f32.gmra.mrb[0].mxu0 %v308
    %v448 = vpop.f32.mrb[0].mxu0
    %v449 = vadd.f32 %v351, %v448
    %v450 = vpop.f32.mrb[0].mxu0
    %v451 = vadd.f32 %v355, %v450
    %452 = vmatprep.mubr.f32.mxu0 0.0
    %453 = vmatmul.mubr.f32.gmra.mrb[0].mxu0 %v309
    %v454 = vpop.f32.mrb[0].mxu0
    %v455 = vadd.f32 %v351, %v454
    %v456 = vpop.f32.mrb[0].mxu0
    %v457 = vadd.f32 %v355, %v456
    %458 = vmatprep.mubr.f32.mxu0 0.0
    %459 = vmatmul.mubr.f32.gmra.mrb[0].mxu0 %v310
    %v460 = vpop.f32.mrb[0].mxu0
    %v461 = vadd.f32 %v351, %v460
    %v462 = vpop.f32.mrb[0].mxu0
    %v463 = vadd.f32 %v355, %v462
    %464 = vmatprep.mubr.f32.mxu0 0.0
    %465 = vmatmul.mubr.f32.gmra.mrb[0].mxu0 %v311
    %v466 = vpop.f32.mrb[0].mxu0
    %v467 = vadd.f32 %v351, %v466
    %v468 = vpop.f32.mrb[0].mxu0
    %v469 = vadd.f32 %v355, %v468
    %470 = vdwg.mxu0
    %v471 = vxor.u32 %v425, 2147483648
    %v472 = vxor.u32 %v431, 2147483648
    %v473 = vxor.u32 %v437, 2147483648
    %v474 = vxor.u32 %v443, 2147483648
    %v475 = vxor.u32 %v449, 2147483648
    %v476 = vxor.u32 %v455, 2147483648
    %v477 = vxor.u32 %v461, 2147483648
    %v478 = vxor.u32 %v467, 2147483648
    %v479 = vmul.f32 %v471, 1.442695
    %v480 = vpow.pop %v479
    %v481 = vmul.f32 %v472, 1.442695
    %v482 = vpow.pop %v481
    %v483 = vmul.f32 %v473, 1.442695
    %v484 = vpow.pop %v483
    %v485 = vmul.f32 %v474, 1.442695
    %v486 = vpow.pop %v485
    %v487 = vmul.f32 %v475, 1.442695
    %v488 = vpow.pop %v487
    %v489 = vmul.f32 %v476, 1.442695
    %v490 = vpow.pop %v489
    %v491 = vmul.f32 %v477, 1.442695
    %v492 = vpow.pop %v491
    %v493 = vmul.f32 %v478, 1.442695
    %v494 = vpow.pop %v493
    %v495 = vadd.f32 %v480, 1.0
    %v496 = vadd.f32 %v482, 1.0
    %v497 = vadd.f32 %v484, 1.0
    %v498 = vadd.f32 %v486, 1.0
    %v499 = vadd.f32 %v488, 1.0
    %v500 = vadd.f32 %v490, 1.0
    %v501 = vadd.f32 %v492, 1.0
    %v502 = vadd.f32 %v494, 1.0
    %v503 = vrcp.pop %v495
    %v504 = vmul.f32 1.0, %v503
    %v505 = vrcp.pop %v496
    %v506 = vmul.f32 1.0, %v505
    %v507 = vrcp.pop %v497
    %v508 = vmul.f32 1.0, %v507
    %v509 = vrcp.pop %v498
    %v510 = vmul.f32 1.0, %v509
    %v511 = vrcp.pop %v499
    %v512 = vmul.f32 1.0, %v511
    %v513 = vrcp.pop %v500
    %v514 = vmul.f32 1.0, %v513
    %v515 = vrcp.pop %v501
    %v516 = vmul.f32 1.0, %v515
    %v517 = vrcp.pop %v502
    %v518 = vmul.f32 1.0, %v517
    %v519 = vtanh.pop %v427
    %v520 = vtanh.pop %v433
    %v521 = vtanh.pop %v439
    %v522 = vtanh.pop %v445
    %v523 = vtanh.pop %v451
    %v524 = vtanh.pop %v457
    %v525 = vtanh.pop %v463
    %v526 = vtanh.pop %v469
    %v527 = vsub.f32 %v519, %v304
    %v528 = vsub.f32 %v520, %v305
    %v529 = vsub.f32 %v521, %v306
    %v530 = vsub.f32 %v522, %v307
    %v531 = vsub.f32 %v523, %v308
    %v532 = vsub.f32 %v524, %v309
    %v533 = vsub.f32 %v525, %v310
    %v534 = vsub.f32 %v526, %v311
    %v535 = vmul.f32 %v504, %v527
    %v536 = vmul.f32 %v506, %v528
    %v537 = vmul.f32 %v508, %v529
    %v538 = vmul.f32 %v510, %v530
    %v539 = vmul.f32 %v512, %v531
    %v540 = vmul.f32 %v514, %v532
    %v541 = vmul.f32 %v516, %v533
    %v542 = vmul.f32 %v518, %v534
    %v543 = vadd.f32 %v304, %v535
    %v544 = vadd.f32 %v305, %v536
    %v545 = vadd.f32 %v306, %v537
    %v546 = vadd.f32 %v307, %v538
    %v547 = vadd.f32 %v308, %v539
    %v548 = vadd.f32 %v309, %v540
    %v549 = vadd.f32 %v310, %v541
    %v550 = vadd.f32 %v311, %v542
    %v551 = vld [vmem:[#allocation2] sm:$0xff]
    %v552 = vadd.f32 %v543, %v544
    %v553 = vadd.f32 %v552, %v545
    %v554 = vadd.f32 %v553, %v546
    %v555 = vadd.f32 %v554, %v547
    %v556 = vadd.f32 %v555, %v548
    %v557 = vadd.f32 %v556, %v549
    %v558 = vadd.f32 %v557, %v550
    %v559 = vadd.f32 %v551, %v558
    %560 = vst [vmem:[#allocation2] sm:$0xff] %v559
    // Predicated region
    $region38: #{tpu_custom_call.1} parent=1 // pred_check
      %p561 = pneg %p62
    $region39: #{tpu_custom_call.1} parent=1 // pred_check_branch
      %563 = sbr.rel (%p561) target = $region41
    $region40: #{tpu_custom_call.1} parent=1 // pred_region
      %v564 = vld [vmem:[#allocation2] sm:$0xff]
      %v565 = vld [vmem:[#allocation8] sm:$0xff]
      %v566 = vld [vmem:[#allocation8 + $0x8] sm:$0xff]
      %v567 = vld [vmem:[#allocation8 + $0x10] sm:$0xff]
      %v568 = vld [vmem:[#allocation8 + $0x18] sm:$0xff]
      %v569 = vld [vmem:[#allocation8 + $0x20] sm:$0xff]
      %v570 = vld [vmem:[#allocation8 + $0x28] sm:$0xff]
      %v571 = vld [vmem:[#allocation8 + $0x30] sm:$0xff]
      %v572 = vld [vmem:[#allocation8 + $0x38] sm:$0xff]
      %v573 = vld [vmem:[#allocation8 + $0x40] sm:$0xff]
      %v574 = vld [vmem:[#allocation8 + $0x48] sm:$0xff]
      %v575 = vld [vmem:[#allocation8 + $0x50] sm:$0xff]
      %v576 = vld [vmem:[#allocation8 + $0x58] sm:$0xff]
      %v577 = vld [vmem:[#allocation8 + $0x60] sm:$0xff]
      %v578 = vld [vmem:[#allocation8 + $0x68] sm:$0xff]
      %v579 = vld [vmem:[#allocation8 + $0x70] sm:$0xff]
      %v580 = vld [vmem:[#allocation8 + $0x78] sm:$0xff]
      %v581 = vld [vmem:[%s4] sm:$0x1]
      %v583 = vlaneseq
      %v584 = vshrl.u32 %v583, 7
      %v585 = vsub.s32 0, %v584
      %v586 = vrot.slane %v581, %v585
      %588 = vmatprep.subr.mxu0 0.0
      %589 = vmatpush1.msra.mxu0 %v565
      %590 = vmatprep.subr.mxu0 0.0
      %591 = vmatpush1.msra.mxu0 %v566
      %592 = vmatprep.subr.mxu0 0.0
      %593 = vmatpush1.msra.mxu0 %v567
      %594 = vmatprep.subr.mxu0 0.0
      %595 = vmatpush1.msra.mxu0 %v568
      %596 = vmatprep.subr.mxu0 0.0
      %597 = vmatpush1.msra.mxu0 %v569
      %598 = vmatprep.subr.mxu0 0.0
      %599 = vmatpush1.msra.mxu0 %v570
      %600 = vmatprep.subr.mxu0 0.0
      %601 = vmatpush1.msra.mxu0 %v571
      %602 = vmatprep.subr.mxu0 0.0
      %603 = vmatpush1.msra.mxu0 %v572
      %604 = vmatprep.subr.mxu0 0.0
      %605 = vmatpush1.msra.mxu0 %v573
      %606 = vmatprep.subr.mxu0 0.0
      %607 = vmatpush1.msra.mxu0 %v574
      %608 = vmatprep.subr.mxu0 0.0
      %609 = vmatpush1.msra.mxu0 %v575
      %610 = vmatprep.subr.mxu0 0.0
      %611 = vmatpush1.msra.mxu0 %v576
      %612 = vmatprep.subr.mxu0 0.0
      %613 = vmatpush1.msra.mxu0 %v577
      %614 = vmatprep.subr.mxu0 0.0
      %615 = vmatpush1.msra.mxu0 %v578
      %616 = vmatprep.subr.mxu0 0.0
      %617 = vmatpush1.msra.mxu0 %v579
      %618 = vmatprep.subr.mxu0 0.0
      %619 = vmatpush1.msra.mxu0 %v580
      %620 = vmatprep.subr.mxu0 0.0
      %621 = vmatpush1.msra.mxu0 0.0
      %622 = vmatprep.subr.mxu0 0.0
      %623 = vmatpush1.msra.mxu0 0.0
      %624 = vmatprep.subr.mxu0 0.0
      %625 = vmatpush1.msra.mxu0 0.0
      %626 = vmatprep.subr.mxu0 0.0
      %627 = vmatpush1.msra.mxu0 0.0
      %628 = vmatprep.subr.mxu0 0.0
      %629 = vmatpush1.msra.mxu0 0.0
      %630 = vmatprep.subr.mxu0 0.0
      %631 = vmatpush1.msra.mxu0 0.0
      %632 = vmatprep.subr.mxu0 0.0
      %633 = vmatpush1.msra.mxu0 0.0
      %634 = vmatprep.subr.mxu0 0.0
      %635 = vmatpush1.msra.mxu0 0.0
      %636 = vmatprep.subr.mxu0 0.0
      %637 = vmatpush1.msra.mxu0 0.0
      %638 = vmatprep.subr.mxu0 0.0
      %639 = vmatpush1.msra.mxu0 0.0
      %640 = vmatprep.subr.mxu0 0.0
      %641 = vmatpush1.msra.mxu0 0.0
      %642 = vmatprep.subr.mxu0 0.0
      %643 = vmatpush1.msra.mxu0 0.0
      %644 = vmatprep.subr.mxu0 0.0
      %645 = vmatpush1.msra.mxu0 0.0
      %646 = vmatprep.subr.mxu0 0.0
      %647 = vmatpush1.msra.mxu0 0.0
      %648 = vmatprep.subr.mxu0 0.0
      %649 = vmatpush1.msra.mxu0 0.0
      %650 = vmatprep.subr.mxu0 0.0
      %651 = vmatpush1.msra.mxu0 0.0
      %652 = vmatprep.mubr.f32.mxu0 0.0
      %653 = vmatmul.mubr.f32.gmra.mrb[0].mxu0 %v564
      %v654 = vpop.f32.mrb[0].mxu0
      %v655 = vadd.f32 %v586, %v654
      %v656 = vpop.f32.mrb[0].mxu0
      %657 = vdwg.mxu0
      %658 = vst [vmem:[#allocation9] sm:$0xff] %v655
    $region41: #{tpu_custom_call.1} parent=1 // pred_fallthru
      _
    // Predicated region
    $region42: #{tpu_custom_call.1} parent=1 // pred_check
      _
    $region43: #{tpu_custom_call.1} parent=1 // pred_check_branch
      %660 = sbr.rel (0) target = $region45
    $region44: #{tpu_custom_call.1} parent=1 // pred_region
      %s662 = ssub.s32 128, 128
      %663 = vsyncadd [#allocation5], %s662
      %s665 = sshll.u32 [#allocation9], 4
      %s666 = int_to_ptr.vmem [resolvable:$true] %s665
      %668 = dma.vmem_to_hbm [thread:$0]  %s666, 128, %s5, [#allocation5]
    $region45: #{tpu_custom_call.1} parent=1 // pred_fallthru
      _
    // Predicated region
    $region46: #{tpu_custom_call.1} parent=1 // pred_check
      _
    $region47: #{tpu_custom_call.1} parent=1 // pred_check_branch
      %670 = sbr.rel (0) target = $region49
    $region48: #{tpu_custom_call.1} parent=1 // pred_region
      %671 = dma.done [#allocation5], 128
    $region49: #{tpu_custom_call.1} parent=1 // pred_fallthru
      _
    %672 = vsyncpa [#allocation4], 1
    %673 = vsyncpa [#allocation7], 1
    %674 = vsyncpa [#allocation5], 1

</llo_original>
